<compile_context>
chip_gen: v7x
topology: tpu7x:2x2x1
jax: 0.10.0
libtpu: 0.0.40
codegen_flags: <defaults>
</compile_context>

<pallas_src>
import jax
import jax.numpy as jnp
from jax.experimental import pallas as pl
from jax.experimental.pallas import tpu as pltpu

LANE = 128
MAX_ROW_TILE = 4096                 # 4096 x 128 f32 = 2 MiB per input block
CHUNK_CANDIDATES = (64, 32, 16, 8)  # in-kernel fori_loop chunk (rows)
EPS = 1e-05
VMEM_LIMIT_BYTES = 32 * 1024 * 1024


def _round_up(x, m):
    return ((x + m - 1) // m) * m


def _tensorcores_per_chip():
    """Best-effort TensorCore count (v7x has 2 per chip); fall back to 1."""
    try:
        info = pltpu.get_tpu_info()
    except Exception:
        return 1
    for attr in ("num_cores", "core_count", "num_tensorcores",
                 "tensorcore_count", "cores_per_chip"):
        v = getattr(info, attr, None)
        if isinstance(v, int) and v > 0:
            return v
    return 1


def _make_kernel(row_tile, chunk, tiles_per_split, tiles_total,
                 valid_rows_last_tile, needs_mask):
    n_chunks = row_tile // chunk

    def _accumulate(p_ref, t_ref, masked):
        # Loop over (chunk, 128) sub-blocks; keep three (8,128) f32 vreg
        # accumulators in the loop carry so no full-tile temporary exists.
        def body(i, carry):
            acc_pt, acc_p, acc_t = carry
            start = pl.multiple_of(i * chunk, chunk)
            pc = p_ref[pl.ds(start, chunk), :].astype(jnp.float32)
            tc = t_ref[pl.ds(start, chunk), :].astype(jnp.float32)
            if masked:
                rid = (jax.lax.broadcasted_iota(jnp.int32, (chunk, LANE), 0)
                       + start)
                valid = rid < valid_rows_last_tile
                pc = jnp.where(valid, pc, 0.0)   # select: NaN garbage cannot leak
                tc = jnp.where(valid, tc, 0.0)
            pc3 = pc.reshape(chunk // 8, 8, LANE)
            tc3 = tc.reshape(chunk // 8, 8, LANE)
            acc_pt = acc_pt + jnp.sum(pc3 * tc3, axis=0)   # intersection
            acc_p = acc_p + jnp.sum(pc3, axis=0)           # sum(pred)
            acc_t = acc_t + jnp.sum(tc3, axis=0)           # sum(true)
            return acc_pt, acc_p, acc_t

        zeros = jnp.zeros((8, LANE), jnp.float32)
        acc_pt, acc_p, acc_t = jax.lax.fori_loop(
            0, n_chunks, body, (zeros, zeros, zeros))
        return jnp.stack([acc_pt, acc_p, acc_t], axis=0)    # (3, 8, 128)

    def kernel(p_ref, t_ref, out_ref):
        s = pl.program_id(0)    # TensorCore split (parallel when >1 core)
        k = pl.program_id(1)    # row-tile within split (reduction axis)

        @pl.when(k == 0)
        def _():
            out_ref[...] = jnp.zeros_like(out_ref)

        if needs_mask:
            # Only the single last real tile pays for the mask; everything
            # else takes the unmasked fast path.
            is_last = (s * tiles_per_split + k) == (tiles_total - 1)

            @pl.when(is_last)
            def _():
                out_ref[0] += _accumulate(p_ref, t_ref, masked=True)

            @pl.when(jnp.logical_not(is_last))
            def _():
                out_ref[0] += _accumulate(p_ref, t_ref, masked=False)
        else:
            out_ref[0] += _accumulate(p_ref, t_ref, masked=False)

    return kernel


def boundary_loss(pred_boundaries, true_boundaries, weight_boundary=0.03):
    """weight_boundary * (1 - (2*sum(p*t)+eps) / (sum(p)+sum(t)+eps))."""
    assert pred_boundaries.shape == true_boundaries.shape

    p = pred_boundaries.reshape(-1)   # native dtype kept; cast per-chunk in kernel
    t = true_boundaries.reshape(-1)
    total = p.shape[0]

    # Sublane packing granularity: f32 -> 8 rows/vreg, bf16 -> 16, int8/fp8 -> 32.
    itemsize = min(jnp.dtype(p.dtype).itemsize, jnp.dtype(t.dtype).itemsize)
    sub = 8 * max(1, 4 // max(1, itemsize))
    granule = sub * LANE

    # Pad only when the flat length is not already lane/sublane aligned (rare);
    # the common case does a single pass with no extra HBM copy.
    padded = _round_up(total, granule)
    if padded != total:
        p = jnp.pad(p, (0, padded - total))
        t = jnp.pad(t, (0, padded - total))
    rows = padded // LANE
    p2 = p.reshape(rows, LANE)
    t2 = t.reshape(rows, LANE)

    row_tile = min(MAX_ROW_TILE, rows)          # rows is a multiple of `sub`
    tiles_total = -(-rows // row_tile)
    needs_mask = (tiles_total * row_tile) != rows
    valid_rows_last_tile = rows - (tiles_total - 1) * row_tile

    # Multi-TensorCore split only when the chip has >1 core AND the split is
    # exact (no fully out-of-bounds block DMAs); single-TC chips use 1 split.
    cores = _tensorcores_per_chip()
    if cores > 1 and tiles_total >= cores and tiles_total % cores == 0:
        num_splits = cores
        lead_sem = pltpu.CORE_PARALLEL
    else:
        num_splits = 1
        lead_sem = "arbitrary"
    tiles_per_split = tiles_total // num_splits

    chunk = next(c for c in CHUNK_CANDIDATES if row_tile % c == 0)

    kernel = _make_kernel(row_tile, chunk, tiles_per_split, tiles_total,
                          valid_rows_last_tile, needs_mask)

    partials = pl.pallas_call(
        kernel,
        out_shape=jax.ShapeDtypeStruct((num_splits, 3, 8, LANE), jnp.float32),
        grid_spec=pltpu.PrefetchScalarGridSpec(
            num_scalar_prefetch=0,
            grid=(num_splits, tiles_per_split),
            in_specs=[
                pl.BlockSpec((row_tile, LANE),
                             lambda s, k, tps=tiles_per_split: (s * tps + k, 0)),
                pl.BlockSpec((row_tile, LANE),
                             lambda s, k, tps=tiles_per_split: (s * tps + k, 0)),
            ],
            out_specs=pl.BlockSpec((1, 3, 8, LANE),
                                   lambda s, k: (s, 0, 0, 0)),
        ),
        compiler_params=pltpu.CompilerParams(
            dimension_semantics=(lead_sem, "arbitrary"),
            vmem_limit_bytes=VMEM_LIMIT_BYTES),
    )(p2, t2)

    # Tiny epilogue in plain JAX: combine per-split (3,8,128) vector partials.
    inter = jnp.sum(partials[:, 0])
    union = jnp.sum(partials[:, 1]) + jnp.sum(partials[:, 2])
    loss = 1.0 - (2.0 * inter + EPS) / (union + EPS)
    return weight_boundary * loss


def boundary_loss_ref(pred, true, weight_boundary=0.03):
    p = pred.astype(jnp.float32)
    t = true.astype(jnp.float32)
    inter = jnp.sum(p * t)
    union = jnp.sum(p) + jnp.sum(t)
    return weight_boundary * (1.0 - (2.0 * inter + EPS) / (union + EPS))


if __name__ == "__main__":
    key = jax.random.PRNGKey(0)
    k1, k2 = jax.random.split(key)
    # Synthetic "boundary maps" in [0, 1], NCHW shape (2, 4, 16, 16).
    pred = jax.nn.sigmoid(jax.random.normal(k1, (2, 4, 16, 16), jnp.float32))
    true = (jax.random.uniform(k2, (2, 4, 16, 16)) > 0.5).astype(jnp.float32)

    out = boundary_loss(pred, true)
    out = jax.block_until_ready(out)

    ref = boundary_loss_ref(pred, true)
    assert jnp.allclose(out, ref, atol=1e-6, rtol=1e-5), (out, ref)
    print("KERNEL_OK")
</pallas_src>

<mosaic_0001>
module attributes {stable_mosaic.version = 11 : i64} {
  func.func @kernel(%arg0: i32, %arg1: i32, %arg2: memref<16x128xf32, #tpu.memory_space<vmem>>, %arg3: memref<16x128xf32, #tpu.memory_space<vmem>>, %arg4: memref<1x3x8x128xf32, #tpu.memory_space<vmem>>) attributes {dimension_semantics = [#tpu.dimension_semantics<arbitrary>, #tpu.dimension_semantics<arbitrary>], iteration_bounds = array<i64: 1, 1>, scalar_prefetch = 0 : i64, scratch_operands = 0 : i64, tpu.core_type = #tpu.core_type<tc>, window_params = [{transform_indices = @transform_0, window_bounds = array<i64: 16, 128>}, {transform_indices = @transform_1, window_bounds = array<i64: 16, 128>}, {transform_indices = @transform_2, window_bounds = array<i64: 1, 3, 8, 128>}]} {
    %c0_i32 = arith.constant 0 : i32
    %0 = arith.cmpi eq, %arg1, %c0_i32 : i32
    %1 = arith.extui %0 : i1 to i32
    %c0_i32_0 = arith.constant 0 : i32
    %2 = arith.cmpi ne, %1, %c0_i32_0 : i32
    scf.if %2 {
      %cst_14 = arith.constant 0.000000e+00 : f32
      %29 = vector.broadcast %cst_14 : f32 to vector<1x3x8x128xf32>
      %c0_15 = arith.constant 0 : index
      %c0_16 = arith.constant 0 : index
      %c0_17 = arith.constant 0 : index
      %c0_18 = arith.constant 0 : index
      %30 = vector.load %arg4[%c0_15, %c0_16, %c0_17, %c0_18] : memref<1x3x8x128xf32, #tpu.memory_space<vmem>>, vector<1x3x8x128xf32>
      tpu.vector_store %arg4[%c0_15, %c0_16, %c0_17, %c0_18], %29 {strides = array<i32>} : memref<1x3x8x128xf32, #tpu.memory_space<vmem>>, vector<1x3x8x128xf32>,
    } else {
    }
    %c0 = arith.constant 0 : index
    %c0_1 = arith.constant 0 : index
    %c0_2 = arith.constant 0 : index
    %c0_3 = arith.constant 0 : index
    %3 = vector.load %arg4[%c0, %c0_1, %c0_2, %c0_3] : memref<1x3x8x128xf32, #tpu.memory_space<vmem>>, vector<1x3x8x128xf32>
    %4 = vector.shape_cast %3 : vector<1x3x8x128xf32> to vector<3x8x128xf32>
    %cst = arith.constant 0.000000e+00 : f32
    %5 = vector.broadcast %cst : f32 to vector<8x128xf32>
    %c0_i32_4 = arith.constant 0 : i32
    %c16_i32 = arith.constant 16 : i32
    %6 = arith.muli %c0_i32_4, %c16_i32 : i32
    %7 = tpu.assume_multiple %6, 16 : i32
    %8 = arith.index_cast %7 : i32 to index
    %c0_5 = arith.constant 0 : index
    %9 = vector.load %arg2[%8, %c0_5] : memref<16x128xf32, #tpu.memory_space<vmem>>, vector<16x128xf32>
    %10 = arith.index_cast %7 : i32 to index
    %c0_6 = arith.constant 0 : index
    %11 = vector.load %arg3[%10, %c0_6] : memref<16x128xf32, #tpu.memory_space<vmem>>, vector<16x128xf32>
    %12 = vector.shape_cast %9 : vector<16x128xf32> to vector<2x8x128xf32>
    %13 = vector.shape_cast %11 : vector<16x128xf32> to vector<2x8x128xf32>
    %14 = arith.mulf %12, %13 : vector<2x8x128xf32>
    %cst_7 = arith.constant dense<0.000000e+00> : vector<8x128xf32>
    %15 = vector.multi_reduction <add>, %14, %cst_7 [0] : vector<2x8x128xf32> to vector<8x128xf32>
    %16 = arith.addf %5, %15 : vector<8x128xf32>
    %cst_8 = arith.constant dense<0.000000e+00> : vector<8x128xf32>
    %17 = vector.multi_reduction <add>, %12, %cst_8 [0] : vector<2x8x128xf32> to vector<8x128xf32>
    %18 = arith.addf %5, %17 : vector<8x128xf32>
    %cst_9 = arith.constant dense<0.000000e+00> : vector<8x128xf32>
    %19 = vector.multi_reduction <add>, %13, %cst_9 [0] : vector<2x8x128xf32> to vector<8x128xf32>
    %20 = arith.addf %5, %19 : vector<8x128xf32>
    %c1_i32 = arith.constant 1 : i32
    %21 = vector.shape_cast %16 : vector<8x128xf32> to vector<1x8x128xf32>
    %22 = vector.shape_cast %18 : vector<8x128xf32> to vector<1x8x128xf32>
    %23 = vector.shape_cast %20 : vector<8x128xf32> to vector<1x8x128xf32>
    %24 = tpu.concatenate %21, %22, %23 in 0 : vector<1x8x128xf32>, vector<1x8x128xf32>, vector<1x8x128xf32> -> vector<3x8x128xf32>
    %25 = arith.addf %4, %24 : vector<3x8x128xf32>
    %c0_10 = arith.constant 0 : index
    %c0_11 = arith.constant 0 : index
    %c0_12 = arith.constant 0 : index
    %c0_13 = arith.constant 0 : index
    %26 = vector.load %arg4[%c0_10, %c0_11, %c0_12, %c0_13] : memref<1x3x8x128xf32, #tpu.memory_space<vmem>>, vector<1x3x8x128xf32>
    %27 = vector.shape_cast %26 : vector<1x3x8x128xf32> to vector<3x8x128xf32>
    %28 = vector.shape_cast %25 : vector<3x8x128xf32> to vector<1x3x8x128xf32>
    tpu.vector_store %arg4[%c0_10, %c0_11, %c0_12, %c0_13], %28 {strides = array<i32>} : memref<1x3x8x128xf32, #tpu.memory_space<vmem>>, vector<1x3x8x128xf32>,
    return
  }
  func.func @transform_0(%arg0: i32, %arg1: i32) -> (i32, i32) {
    %c1_i32 = arith.constant 1 : i32
    %0 = arith.muli %arg0, %c1_i32 : i32
    %1 = arith.addi %0, %arg1 : i32
    %c0_i32 = arith.constant 0 : i32
    %c0_i32_0 = arith.constant 0 : i32
    return %1, %c0_i32 : i32, i32
  }
  func.func @transform_1(%arg0: i32, %arg1: i32) -> (i32, i32) {
    %c1_i32 = arith.constant 1 : i32
    %0 = arith.muli %arg0, %c1_i32 : i32
    %1 = arith.addi %0, %arg1 : i32
    %c0_i32 = arith.constant 0 : i32
    %c0_i32_0 = arith.constant 0 : i32
    return %1, %c0_i32 : i32, i32
  }
  func.func @transform_2(%arg0: i32, %arg1: i32) -> (i32, i32, i32, i32) {
    %c0_i32 = arith.constant 0 : i32
    %c0_i32_0 = arith.constant 0 : i32
    %c0_i32_1 = arith.constant 0 : i32
    %c0_i32_2 = arith.constant 0 : i32
    return %arg0, %c0_i32, %c0_i32_0, %c0_i32_1 : i32, i32, i32, i32
  }
}

</mosaic_0001>

<llo_original>
// kernel: tpu_custom_call.1
$region0: #{tpu_custom_call.1}
  #allocation0 [shape = 'u32[]', space=smem, size = 0x4, offset = 0x4, fixed_abs, tag = 'smem constant byte address 0x4 - core index']
  #allocation1 [shape = 'u32[144,128]{1,0:T(1,128)}', space=vmem, size = 0x12000, scoped, tag = 'internal scratch']
  %s0 = inlined_call_operand.hbm [shape: f32[16,128], index: 0, kind: input, shape index: {}]
  %s1 = inlined_call_operand.hbm [shape: f32[16,128], index: 1, kind: input, shape index: {}]
  %s2 = inlined_call_operand.hbm [shape: f32[1,3,8,128], index: 2, kind: output, shape index: {}]
  %s3 = sld [smem:[#allocation0]]
  $region30: #{tpu_custom_call.1} parent=0
    _
  %s5 = ssub.s32 1, %s3
  %s6 = scalar_select 0, %s5, %s3
  $region1: #{tpu_custom_call.1} parent=0
    #allocation2 [shape = 'u8[8192]{0}', space=vmem, size = 0x2000, scoped, tag = 'input window, operand 0, single buffered']
    #allocation3 [shape = 's32[1]{0}', space=sflag, size = 0x4, scoped, tag = 'scoped memory for tpu_custom_call.1']
    #allocation4 [shape = 's32[1]{0}', space=sflag, size = 0x4, scoped, tag = 'scoped memory for tpu_custom_call.1']
    #allocation5 [shape = 'u8[8192]{0}', space=vmem, size = 0x2000, scoped, tag = 'input window, operand 1, single buffered']
    #allocation6 [shape = 's32[1]{0}', space=sflag, size = 0x4, scoped, tag = 'scoped memory for tpu_custom_call.1']
    #allocation7 [shape = 'u8[12288]{0}', space=vmem, size = 0x3000, scoped, tag = 'output window, operand 0, single buffered']
    %7 = vsyncpa [#allocation3], 0
    %8 = vsyncpa [#allocation6], 0
    %9 = vsyncpa [#allocation4], 0
    // Predicated region
    $region2: #{tpu_custom_call.1} parent=1 // pred_check
      _
    $region3: #{tpu_custom_call.1} parent=1 // pred_check_branch
      %11 = sbr.rel (0) target = $region5
    $region4: #{tpu_custom_call.1} parent=1 // pred_region
      %s12 = sadd.s32 0, 0
      %s13 = smul.u32 2, %s12
      %s15 = ssub.s32 256, 256
      %16 = vsyncadd [#allocation3], %s15
      %s17 = smul.addr %s13, 128
      %s18 = scalar_lea.hbm %s0, %s17
      %s19 = sshll.u32 [#allocation2], 4
      %s20 = int_to_ptr.vmem [resolvable:$true] %s19
      %25 = dma.hbm_to_vmem [thread:$0]  %s18, 256, %s20, [#allocation3], 128, 128, 8
    $region5: #{tpu_custom_call.1} parent=1 // pred_fallthru
      _
    // Predicated region
    $region6: #{tpu_custom_call.1} parent=1 // pred_check
      _
    $region7: #{tpu_custom_call.1} parent=1 // pred_check_branch
      %27 = sbr.rel (0) target = $region9
    $region8: #{tpu_custom_call.1} parent=1 // pred_region
      %s28 = sadd.s32 0, 0
      %s29 = smul.u32 2, %s28
      %s31 = ssub.s32 256, 256
      %32 = vsyncadd [#allocation6], %s31
      %s33 = smul.addr %s29, 128
      %s34 = scalar_lea.hbm %s1, %s33
      %s35 = sshll.u32 [#allocation5], 4
      %s36 = int_to_ptr.vmem [resolvable:$true] %s35
      %41 = dma.hbm_to_vmem [thread:$0]  %s34, 256, %s36, [#allocation6], 128, 128, 8
    $region9: #{tpu_custom_call.1} parent=1 // pred_fallthru
      _
    // Predicated region
    $region10: #{tpu_custom_call.1} parent=1 // pred_check
      _
    $region11: #{tpu_custom_call.1} parent=1 // pred_check_branch
      %43 = sbr.rel (0) target = $region13
    $region12: #{tpu_custom_call.1} parent=1 // pred_region
      %44 = dma.done [#allocation3], 256
    $region13: #{tpu_custom_call.1} parent=1 // pred_fallthru
      _
    // Predicated region
    $region14: #{tpu_custom_call.1} parent=1 // pred_check
      _
    $region15: #{tpu_custom_call.1} parent=1 // pred_check_branch
      %46 = sbr.rel (0) target = $region17
    $region16: #{tpu_custom_call.1} parent=1 // pred_region
      %47 = dma.done [#allocation6], 256
    $region17: #{tpu_custom_call.1} parent=1 // pred_fallthru
      _
    %s48 = sadd.s32 0, 0
    %s49 = smul.u32 2, %s48
    %s50 = sadd.s32 0, 0
    %s51 = smul.u32 2, %s50
    %p52 = scmp.eq.s32.totalorder 0, 0
    // Predicated region
    $region18: #{tpu_custom_call.1} parent=1 // pred_check
      %p53 = pneg %p52
    $region19: #{tpu_custom_call.1} parent=1 // pred_check_branch
      %55 = sbr.rel (%p53) target = $region21
    $region20: #{tpu_custom_call.1} parent=1 // pred_region
      %56 = vst [vmem:[#allocation7] sm:$0xff] 0.0
      %57 = vst [vmem:[#allocation7 + $0x8] sm:$0xff] 0.0
      %58 = vst [vmem:[#allocation7 + $0x10] sm:$0xff] 0.0
    $region21: #{tpu_custom_call.1} parent=1 // pred_fallthru
      _
    %v59 = vld [vmem:[#allocation7] sm:$0xff]
    %v60 = vld [vmem:[#allocation7 + $0x8] sm:$0xff]
    %v61 = vld [vmem:[#allocation7 + $0x10] sm:$0xff]
    %v62 = vld [vmem:[#allocation2] sm:$0xff]
    %v63 = vld [vmem:[#allocation2 + $0x8] sm:$0xff]
    %v64 = vld [vmem:[#allocation5] sm:$0xff]
    %v65 = vld [vmem:[#allocation5 + $0x8] sm:$0xff]
    %v66 = vmul.f32 %v62, %v64
    %v67 = vmul.f32 %v63, %v65
    %v68 = vadd.f32 %v66, %v67
    %v69 = vadd.f32 %v68, 0.0
    %v70 = vadd.f32 %v62, %v63
    %v71 = vadd.f32 %v70, 0.0
    %v72 = vadd.f32 %v64, %v65
    %v73 = vadd.f32 %v72, 0.0
    %v74 = vadd.f32 %v59, %v69
    %v75 = vadd.f32 %v60, %v71
    %v76 = vadd.f32 %v61, %v73
    %77 = vst [vmem:[#allocation7] sm:$0xff] %v74
    %78 = vst [vmem:[#allocation7 + $0x8] sm:$0xff] %v75
    %79 = vst [vmem:[#allocation7 + $0x10] sm:$0xff] %v76
    // Predicated region
    $region22: #{tpu_custom_call.1} parent=1 // pred_check
      _
    $region23: #{tpu_custom_call.1} parent=1 // pred_check_branch
      %81 = sbr.rel (0) target = $region25
    $region24: #{tpu_custom_call.1} parent=1 // pred_region
      %s83 = ssub.s32 384, 384
      %84 = vsyncadd [#allocation4], %s83
      %s85 = sshll.u32 [#allocation7], 4
      %s86 = int_to_ptr.vmem [resolvable:$true] %s85
      %91 = dma.vmem_to_hbm [thread:$0]  %s86, 384, %s2, [#allocation4], 128, 128, 8
    $region25: #{tpu_custom_call.1} parent=1 // pred_fallthru
      _
    // Predicated region
    $region26: #{tpu_custom_call.1} parent=1 // pred_check
      _
    $region27: #{tpu_custom_call.1} parent=1 // pred_check_branch
      %93 = sbr.rel (0) target = $region29
    $region28: #{tpu_custom_call.1} parent=1 // pred_region
      %94 = dma.done [#allocation4], 384
    $region29: #{tpu_custom_call.1} parent=1 // pred_fallthru
      _
    %95 = vsyncpa [#allocation3], 1
    %96 = vsyncpa [#allocation6], 1
    %97 = vsyncpa [#allocation4], 1

</llo_original>
